<compile_context>
chip_gen: v7x
topology: tpu7x:2x2x1
jax: 0.10.0
libtpu: 0.0.40
codegen_flags: <defaults>
</compile_context>

<pallas_src>
from functools import partial

import jax
import jax.numpy as jnp
from jax.experimental import pallas as pl
from jax.experimental.pallas import tpu as pltpu

EPS = 1e-5                      # PyTorch BatchNorm1d default eps
VMEM_LIMIT = 48 * 1024 * 1024   # fits v7x's 64 MiB physical; raise on v5e/v6e


def _rup128(d):
    return ((d + 127) // 128) * 128


def _pad2(x, rows, cols):
    return jnp.pad(x, ((0, rows - x.shape[0]), (0, cols - x.shape[1])))


def _cparams(sems):
    return pltpu.CompilerParams(dimension_semantics=sems,
                                vmem_limit_bytes=VMEM_LIMIT)


def _bn_affine(col_sum, col_sumsq, gamma, beta, n):
    """Fold global batch statistics + BN affine into one packed (2, D) scale/shift."""
    # NOTE: single-pass E[x^2]-E[x]^2 in f32; fine for near-zero-mean activations.
    mean = col_sum / n
    var = jnp.maximum(col_sumsq / n - mean * mean, 0.0)   # biased var (training BN)
    scale = gamma * jax.lax.rsqrt(var + EPS)
    shift = beta - mean * scale
    return jnp.concatenate([scale, shift], axis=0)        # (2, D)


# ---------------- pass A: k-tiled aggregation + Linear1 + per-tile BN1 stats ----------------
def _agg_mlp1_kernel(adj_ref, h_ref, w1_ref, z_ref, st_ref, acc_ref, *, gin_eps):
    i = pl.program_id(0)          # destination-node tile
    k = pl.program_id(1)          # source-node (reduction) tile

    @pl.when(k == 0)
    def _():
        acc_ref[...] = jnp.zeros_like(acc_ref)

    # GIN sum-aggregation on the MXU: neigh_tile += A[i-tile, k-tile] @ h[k-tile].
    acc_ref[...] += jnp.dot(adj_ref[...], h_ref[...],
                            preferred_element_type=jnp.float32)

    # The k == i tile of the h stream holds exactly the destination rows of tile i,
    # so the (1 + eps) * h_dst term is added from the same stream (no duplicate input).
    @pl.when(k == i)
    def _():
        acc_ref[...] += (1.0 + gin_eps) * h_ref[...].astype(jnp.float32)

    @pl.when(k == pl.num_programs(1) - 1)
    def _():
        rst = acc_ref[...]
        # Linear1 (bias dropped: no-op before training-mode BatchNorm). bf16 operands,
        # f32 accumulation.
        z = jnp.dot(rst.astype(jnp.bfloat16), w1_ref[...],
                    preferred_element_type=jnp.float32)
        z_ref[...] = z.astype(z_ref.dtype)
        # Per-tile partial BN1 stats (row 0: sum, row 1: sumsq, rows 2-7 padding).
        st_ref[...] = jnp.zeros_like(st_ref)
        st_ref[0:1, :] = jnp.sum(z, axis=0, keepdims=True)
        st_ref[1:2, :] = jnp.sum(z * z, axis=0, keepdims=True)


# ------------- pass B: BN1 (fused affine) + ReLU + Linear2 + per-tile BN2 stats -------------
def _bn_relu_mlp2_kernel(z_ref, aff1_ref, w2_ref, y_ref, st_ref):
    zn = jnp.maximum(z_ref[...].astype(jnp.float32) * aff1_ref[0:1, :]
                     + aff1_ref[1:2, :], 0.0)
    # Linear2 (bias dropped: no-op before the outer training-mode BatchNorm).
    y = jnp.dot(zn.astype(jnp.bfloat16), w2_ref[...],
                preferred_element_type=jnp.float32)
    y_ref[...] = y.astype(y_ref.dtype)
    st_ref[...] = jnp.zeros_like(st_ref)
    st_ref[0:1, :] = jnp.sum(y, axis=0, keepdims=True)
    st_ref[1:2, :] = jnp.sum(y * y, axis=0, keepdims=True)


# ------------------------------ pass C: BN2 (fused affine) + ReLU ------------------------------
def _bn_relu_kernel(y_ref, aff2_ref, o_ref):
    o_ref[...] = jnp.maximum(y_ref[...].astype(jnp.float32) * aff2_ref[0:1, :]
                             + aff2_ref[1:2, :], 0.0)


def gin_conv(adj, h, params, *, gin_eps=0.0, tile_n=512, store_dtype=jnp.bfloat16):
    n, d_in = h.shape
    d_hid = params["w1"].shape[1]
    d_out = params["w2"].shape[1]
    d_in_p, d_hid_p, d_out_p = (_rup128(d) for d in (d_in, d_hid, d_out))

    tile_n = min(tile_n, n)
    # tile_n is used for both the node and the reduction (adjacency lane) axis, so it
    # must be lane-aligned (or equal to N). If node padding is ever added to relax the
    # N % tile_n requirement, the padded rows must be masked out of the BN statistics.
    assert n % tile_n == 0, "wrapper requires N % tile_n == 0"
    assert tile_n % 8 == 0 and (tile_n % 128 == 0 or tile_n == n), \
        "tile_n must be a multiple of 128 (or equal to N)"
    nt = n // tile_n

    # Lane-dense padding of the feature dims + bf16 casts for the MXU / HBM streams.
    adj_b = adj.astype(jnp.bfloat16)                      # 0/1 values: exact in bf16
    h_b = _pad2(h, n, d_in_p).astype(jnp.bfloat16)
    w1_b = _pad2(params["w1"], d_in_p, d_hid_p).astype(jnp.bfloat16)
    w2_b = _pad2(params["w2"], d_hid_p, d_out_p).astype(jnp.bfloat16)
    g1_p, be1_p = _pad2(params["g1"], 1, d_hid_p), _pad2(params["be1"], 1, d_hid_p)
    g2_p, be2_p = _pad2(params["g2"], 1, d_out_p), _pad2(params["be2"], 1, d_out_p)

    # ---- pass A: k-tiled aggregation + Linear1, per-tile BN1 statistics ----
    z, st1 = pl.pallas_call(
        partial(_agg_mlp1_kernel, gin_eps=float(gin_eps)),
        grid=(nt, nt),                                     # (dst tile i, reduction tile k)
        in_specs=[
            pl.BlockSpec((tile_n, tile_n), lambda i, k: (i, k)),     # adjacency tile
            pl.BlockSpec((tile_n, d_in_p), lambda i, k: (k, 0)),     # h source tile
            pl.BlockSpec((d_in_p, d_hid_p), lambda i, k: (0, 0)),    # w1 (resident)
        ],
        out_specs=(
            pl.BlockSpec((tile_n, d_hid_p), lambda i, k: (i, 0)),    # z tiles
            pl.BlockSpec((8, d_hid_p), lambda i, k: (i, 0)),         # per-tile stats
        ),
        out_shape=(
            jax.ShapeDtypeStruct((n, d_hid_p), store_dtype),
            jax.ShapeDtypeStruct((nt * 8, d_hid_p), jnp.float32),
        ),
        scratch_shapes=[pltpu.VMEM((tile_n, d_in_p), jnp.float32)],  # neigh accumulator
        compiler_params=_cparams(("parallel", "arbitrary")),
    )(adj_b, h_b, w1_b)

    st1 = st1.reshape(nt, 8, d_hid_p)
    aff1 = _bn_affine(jnp.sum(st1[:, 0, :], axis=0, keepdims=True),
                      jnp.sum(st1[:, 1, :], axis=0, keepdims=True), g1_p, be1_p, n)

    # ---- pass B: BN1 + ReLU + Linear2, per-tile BN2 statistics ----
    y, st2 = pl.pallas_call(
        _bn_relu_mlp2_kernel,
        grid=(nt,),
        in_specs=[
            pl.BlockSpec((tile_n, d_hid_p), lambda i: (i, 0)),
            pl.BlockSpec((2, d_hid_p), lambda i: (0, 0)),            # packed scale/shift
            pl.BlockSpec((d_hid_p, d_out_p), lambda i: (0, 0)),      # w2 (resident)
        ],
        out_specs=(
            pl.BlockSpec((tile_n, d_out_p), lambda i: (i, 0)),
            pl.BlockSpec((8, d_out_p), lambda i: (i, 0)),
        ),
        out_shape=(
            jax.ShapeDtypeStruct((n, d_out_p), store_dtype),
            jax.ShapeDtypeStruct((nt * 8, d_out_p), jnp.float32),
        ),
        compiler_params=_cparams(("parallel",)),
    )(z, aff1, w2_b)

    st2 = st2.reshape(nt, 8, d_out_p)
    aff2 = _bn_affine(jnp.sum(st2[:, 0, :], axis=0, keepdims=True),
                      jnp.sum(st2[:, 1, :], axis=0, keepdims=True), g2_p, be2_p, n)

    # ---- pass C: BN2 + ReLU (elementwise; parallel over node tiles) ----
    out_p = pl.pallas_call(
        _bn_relu_kernel,
        grid=(nt,),
        in_specs=[
            pl.BlockSpec((tile_n, d_out_p), lambda i: (i, 0)),
            pl.BlockSpec((2, d_out_p), lambda i: (0, 0)),
        ],
        out_specs=pl.BlockSpec((tile_n, d_out_p), lambda i: (i, 0)),
        out_shape=jax.ShapeDtypeStruct((n, d_out_p), jnp.float32),
        compiler_params=_cparams(("parallel",)),
    )(y, aff2)

    return out_p[:, :d_out]


# --------------------------- pure-JAX reference (f32, with biases) ---------------------------
def jax_reference(adj, h, p, gin_eps):
    hp = jax.lax.Precision.HIGHEST
    rst = (1.0 + gin_eps) * h + jnp.dot(adj, h, precision=hp)
    z = jnp.dot(rst, p["w1"], precision=hp) + p["b1"]
    m = z.mean(0, keepdims=True)
    v = ((z - m) ** 2).mean(0, keepdims=True)
    z = jnp.maximum((z - m) * jax.lax.rsqrt(v + EPS) * p["g1"] + p["be1"], 0.0)
    y = jnp.dot(z, p["w2"], precision=hp) + p["b2"]
    m = y.mean(0, keepdims=True)
    v = ((y - m) ** 2).mean(0, keepdims=True)
    return jnp.maximum((y - m) * jax.lax.rsqrt(v + EPS) * p["g2"] + p["be2"], 0.0)


def make_params(key, d_in, d_hid, d_out):
    k1, k2, k3, k4 = jax.random.split(key, 4)
    # Snap weights to bf16-representable f32 so the bf16-operand kernel and the f32
    # reference see the same parameter values (remaining diffs come from the in-kernel
    # bf16 rounding of intermediates, covered by the test tolerance below).
    f = lambda x: x.astype(jnp.bfloat16).astype(jnp.float32)
    return {
        "w1": f(jax.random.normal(k1, (d_in, d_hid), jnp.float32) * 0.1),
        "b1": f(jax.random.normal(k2, (1, d_hid), jnp.float32) * 0.05),
        "g1": jnp.full((1, d_hid), 1.1, jnp.float32),
        "be1": jnp.full((1, d_hid), 0.02, jnp.float32),
        "w2": f(jax.random.normal(k3, (d_hid, d_out), jnp.float32) * 0.1),
        "b2": f(jax.random.normal(k4, (1, d_out), jnp.float32) * 0.05),
        "g2": jnp.full((1, d_out), 0.9, jnp.float32),
        "be2": jnp.full((1, d_out), -0.01, jnp.float32),
    }


if __name__ == "__main__":
    key = jax.random.PRNGKey(0)
    k_adj, k_h, k_p = jax.random.split(key, 3)

    N, D_IN, D_HID, D_OUT = 512, 16, 32, 16       # small graph: 512 nodes, 16-d features
    adj = jax.random.bernoulli(k_adj, 0.05, (N, N)).astype(jnp.float32)
    h = jax.random.normal(k_h, (N, D_IN), jnp.float32).astype(jnp.bfloat16).astype(jnp.float32)
    params = make_params(k_p, D_IN, D_HID, D_OUT)

    # tile_n=128 -> pass A grid (4, 4): exercises the k-tiled reduction and the
    # cross-tile (per-tile partial) BatchNorm statistics.
    out = gin_conv(adj, h, params, gin_eps=0.0, tile_n=128)
    out = jax.block_until_ready(out)

    ref = jax_reference(adj, h, params, 0.0)
    assert out.shape == (N, D_OUT)
    max_err = float(jnp.max(jnp.abs(out - ref)))
    # Tolerance accounts for bf16 MXU operands and bf16 z/y intermediates vs the
    # full-f32 reference (post-BN values are O(1); real bugs show up as O(0.5+) errors).
    assert jnp.allclose(out, ref, atol=5e-2, rtol=5e-2), \
        f"mismatch vs JAX reference (max abs err {max_err})"
    print("KERNEL_OK")
</pallas_src>

<mosaic_0001>
module attributes {stable_mosaic.version = 11 : i64} {
  func.func @_agg_mlp1_kernel(%arg0: i32, %arg1: i32, %arg2: memref<128x128xbf16, #tpu.memory_space<vmem>>, %arg3: memref<128x128xbf16, #tpu.memory_space<vmem>>, %arg4: memref<128x128xbf16, #tpu.memory_space<vmem>>, %arg5: memref<128x128xbf16, #tpu.memory_space<vmem>>, %arg6: memref<8x128xf32, #tpu.memory_space<vmem>>, %arg7: memref<128x128xf32, #tpu.memory_space<vmem>>) attributes {dimension_semantics = [#tpu.dimension_semantics<parallel>, #tpu.dimension_semantics<arbitrary>], iteration_bounds = array<i64: 4, 4>, scalar_prefetch = 0 : i64, scratch_operands = 1 : i64, tpu.core_type = #tpu.core_type<tc>, window_params = [{transform_indices = @transform_0, window_bounds = array<i64: 128, 128>}, {transform_indices = @transform_1, window_bounds = array<i64: 128, 128>}, {pipeline_mode = #tpu.pipeline_mode<synchronous>, transform_indices = @transform_2, window_bounds = array<i64: 128, 128>}, {transform_indices = @transform_3, window_bounds = array<i64: 128, 128>}, {transform_indices = @transform_4, window_bounds = array<i64: 8, 128>}]} {
    %c0_i32 = arith.constant 0 : i32
    %0 = arith.cmpi eq, %arg1, %c0_i32 : i32
    %1 = arith.extui %0 : i1 to i32
    %c0_i32_0 = arith.constant 0 : i32
    %2 = arith.cmpi ne, %1, %c0_i32_0 : i32
    scf.if %2 {
      %cst_10 = arith.constant 0.000000e+00 : f32
      %15 = vector.broadcast %cst_10 : f32 to vector<128x128xf32>
      %c0_11 = arith.constant 0 : index
      %c0_12 = arith.constant 0 : index
      %16 = vector.load %arg7[%c0_11, %c0_12] : memref<128x128xf32, #tpu.memory_space<vmem>>, vector<128x128xf32>
      tpu.vector_store %arg7[%c0_11, %c0_12], %15 {strides = array<i32>} : memref<128x128xf32, #tpu.memory_space<vmem>>, vector<128x128xf32>,
    } else {
    }
    %c0 = arith.constant 0 : index
    %c0_1 = arith.constant 0 : index
    %3 = vector.load %arg7[%c0, %c0_1] : memref<128x128xf32, #tpu.memory_space<vmem>>, vector<128x128xf32>
    %c0_2 = arith.constant 0 : index
    %c0_3 = arith.constant 0 : index
    %4 = vector.load %arg2[%c0_2, %c0_3] : memref<128x128xbf16, #tpu.memory_space<vmem>>, vector<128x128xbf16>
    %c0_4 = arith.constant 0 : index
    %c0_5 = arith.constant 0 : index
    %5 = vector.load %arg3[%c0_4, %c0_5] : memref<128x128xbf16, #tpu.memory_space<vmem>>, vector<128x128xbf16>
    %cst = arith.constant dense<0.000000e+00> : vector<128x128xf32>
    %6 = tpu.matmul %4, %5, %cst {dimension_numbers = #tpu.dot_dimension_numbers<[1], [0], [0], [1], [0, 0, 1, 1], [], []>} : vector<128x128xbf16>, vector<128x128xbf16>, vector<128x128xf32> -> vector<128x128xf32>
    %7 = arith.addf %3, %6 : vector<128x128xf32>
    %c0_6 = arith.constant 0 : index
    %c0_7 = arith.constant 0 : index
    %8 = vector.load %arg7[%c0_6, %c0_7] : memref<128x128xf32, #tpu.memory_space<vmem>>, vector<128x128xf32>
    tpu.vector_store %arg7[%c0_6, %c0_7], %7 {strides = array<i32>} : memref<128x128xf32, #tpu.memory_space<vmem>>, vector<128x128xf32>,
    %9 = arith.cmpi eq, %arg1, %arg0 : i32
    %10 = arith.extui %9 : i1 to i32
    %c0_i32_8 = arith.constant 0 : i32
    %11 = arith.cmpi ne, %10, %c0_i32_8 : i32
    scf.if %11 {
      %c0_10 = arith.constant 0 : index
      %c0_11 = arith.constant 0 : index
      %15 = vector.load %arg7[%c0_10, %c0_11] : memref<128x128xf32, #tpu.memory_space<vmem>>, vector<128x128xf32>
      %c0_12 = arith.constant 0 : index
      %c0_13 = arith.constant 0 : index
      %16 = vector.load %arg3[%c0_12, %c0_13] : memref<128x128xbf16, #tpu.memory_space<vmem>>, vector<128x128xbf16>
      %17 = arith.extf %16 : vector<128x128xbf16> to vector<128x128xf32>
      %cst_14 = arith.constant 1.000000e+00 : f32
      %18 = vector.broadcast %cst_14 : f32 to vector<128x128xf32>
      %19 = arith.mulf %18, %17 : vector<128x128xf32>
      %20 = arith.addf %15, %19 : vector<128x128xf32>
      %c0_15 = arith.constant 0 : index
      %c0_16 = arith.constant 0 : index
      %21 = vector.load %arg7[%c0_15, %c0_16] : memref<128x128xf32, #tpu.memory_space<vmem>>, vector<128x128xf32>
      tpu.vector_store %arg7[%c0_15, %c0_16], %20 {strides = array<i32>} : memref<128x128xf32, #tpu.memory_space<vmem>>, vector<128x128xf32>,
    } else {
    }
    %c3_i32 = arith.constant 3 : i32
    %12 = arith.cmpi eq, %arg1, %c3_i32 : i32
    %13 = arith.extui %12 : i1 to i32
    %c0_i32_9 = arith.constant 0 : i32
    %14 = arith.cmpi ne, %13, %c0_i32_9 : i32
    scf.if %14 {
      %c0_10 = arith.constant 0 : index
      %c0_11 = arith.constant 0 : index
      %15 = vector.load %arg7[%c0_10, %c0_11] : memref<128x128xf32, #tpu.memory_space<vmem>>, vector<128x128xf32>
      %16 = arith.truncf %15 : vector<128x128xf32> to vector<128x128xbf16>
      %c0_12 = arith.constant 0 : index
      %c0_13 = arith.constant 0 : index
      %17 = vector.load %arg4[%c0_12, %c0_13] : memref<128x128xbf16, #tpu.memory_space<vmem>>, vector<128x128xbf16>
      %cst_14 = arith.constant dense<0.000000e+00> : vector<128x128xf32>
      %18 = tpu.matmul %16, %17, %cst_14 {dimension_numbers = #tpu.dot_dimension_numbers<[1], [0], [0], [1], [0, 0, 1, 1], [], []>} : vector<128x128xbf16>, vector<128x128xbf16>, vector<128x128xf32> -> vector<128x128xf32>
      %19 = arith.truncf %18 : vector<128x128xf32> to vector<128x128xbf16>
      %c0_15 = arith.constant 0 : index
      %c0_16 = arith.constant 0 : index
      %20 = vector.load %arg5[%c0_15, %c0_16] : memref<128x128xbf16, #tpu.memory_space<vmem>>, vector<128x128xbf16>
      tpu.vector_store %arg5[%c0_15, %c0_16], %19 {strides = array<i32>} : memref<128x128xbf16, #tpu.memory_space<vmem>>, vector<128x128xbf16>,
      %cst_17 = arith.constant 0.000000e+00 : f32
      %21 = vector.broadcast %cst_17 : f32 to vector<8x128xf32>
      %c0_18 = arith.constant 0 : index
      %c0_19 = arith.constant 0 : index
      %22 = vector.load %arg6[%c0_18, %c0_19] : memref<8x128xf32, #tpu.memory_space<vmem>>, vector<8x128xf32>
      tpu.vector_store %arg6[%c0_18, %c0_19], %21 {strides = array<i32>} : memref<8x128xf32, #tpu.memory_space<vmem>>, vector<8x128xf32>,
      %cst_20 = arith.constant dense<0.000000e+00> : vector<128xf32>
      %23 = vector.multi_reduction <add>, %18, %cst_20 [0] : vector<128x128xf32> to vector<128xf32>
      %24 = vector.shape_cast %23 : vector<128xf32> to vector<1x128xf32>
      %c0_21 = arith.constant 0 : index
      %c0_22 = arith.constant 0 : index
      %25 = vector.load %arg6[%c0_21, %c0_22] : memref<8x128xf32, #tpu.memory_space<vmem>>, vector<1x128xf32>
      tpu.vector_store %arg6[%c0_21, %c0_22], %24 {strides = array<i32>} : memref<8x128xf32, #tpu.memory_space<vmem>>, vector<1x128xf32>,
      %26 = arith.mulf %18, %18 : vector<128x128xf32>
      %cst_23 = arith.constant dense<0.000000e+00> : vector<128xf32>
      %27 = vector.multi_reduction <add>, %26, %cst_23 [0] : vector<128x128xf32> to vector<128xf32>
      %28 = vector.shape_cast %27 : vector<128xf32> to vector<1x128xf32>
      %c1 = arith.constant 1 : index
      %c0_24 = arith.constant 0 : index
      %29 = vector.load %arg6[%c1, %c0_24] : memref<8x128xf32, #tpu.memory_space<vmem>>, vector<1x128xf32>
      tpu.vector_store %arg6[%c1, %c0_24], %28 {strides = array<i32>} : memref<8x128xf32, #tpu.memory_space<vmem>>, vector<1x128xf32>,
    } else {
    }
    return
  }
  func.func @transform_0(%arg0: i32, %arg1: i32) -> (i32, i32) {
    %c0_i32 = arith.constant 0 : i32
    return %arg0, %arg1 : i32, i32
  }
  func.func @transform_1(%arg0: i32, %arg1: i32) -> (i32, i32) {
    %c0_i32 = arith.constant 0 : i32
    %c0_i32_0 = arith.constant 0 : i32
    return %arg1, %c0_i32 : i32, i32
  }
  func.func @transform_2(%arg0: i32, %arg1: i32) -> (i32, i32) {
    %c0_i32 = arith.constant 0 : i32
    %c0_i32_0 = arith.constant 0 : i32
    %c0_i32_1 = arith.constant 0 : i32
    return %c0_i32, %c0_i32_0 : i32, i32
  }
  func.func @transform_3(%arg0: i32, %arg1: i32) -> (i32, i32) {
    %c0_i32 = arith.constant 0 : i32
    %c0_i32_0 = arith.constant 0 : i32
    return %arg0, %c0_i32 : i32, i32
  }
  func.func @transform_4(%arg0: i32, %arg1: i32) -> (i32, i32) {
    %c0_i32 = arith.constant 0 : i32
    %c0_i32_0 = arith.constant 0 : i32
    return %arg0, %c0_i32 : i32, i32
  }
}

</mosaic_0001>

<llo_original>
// kernel: tpu_custom_call.1
$region0: #{tpu_custom_call.1}
  #allocation0 [shape = 'u32[]', space=smem, size = 0x4, offset = 0x4, fixed_abs, tag = 'smem constant byte address 0x4 - core index']
  #allocation1 [shape = 'u32[144,128]{1,0:T(1,128)}', space=vmem, size = 0x12000, scoped, tag = 'internal scratch']
  #allocation2 [shape = 'f32[128,128]{1,0:T(8,128)}', space=vmem, size = 0x10000, scoped, tag = 'scratch operand']
  %s0 = inlined_call_operand.hbm [shape: bf16[512,512], index: 0, kind: input, shape index: {}]
  %s1 = inlined_call_operand.hbm [shape: bf16[512,128], index: 1, kind: input, shape index: {}]
  %s2 = inlined_call_operand.hbm [shape: bf16[128,128], index: 2, kind: input, shape index: {}]
  %s3 = inlined_call_operand.hbm [shape: bf16[512,128], index: 3, kind: output, shape index: {0}]
  %s4 = inlined_call_operand.hbm [shape: f32[32,128], index: 4, kind: output, shape index: {1}]
  %5 = xla_tuple %s3, %s4
  %s6 = sld [smem:[#allocation0]]
  $region77: #{tpu_custom_call.1} parent=0
    _
  %s8 = ssub.s32 1, %s6
  %s9 = scalar_select 0, %s8, %s6
  $region1: #{tpu_custom_call.1} parent=0
    #allocation3 [shape = 'u8[65536]{0}', space=vmem, size = 0x10000, scoped, tag = 'input window, operand 0']
    #allocation4 [shape = 's32[2]{0}', space=sflag, size = 0x8, scoped, tag = 'scoped memory for tpu_custom_call.1']
    #allocation5 [shape = 's32[2]{0}', space=sflag, size = 0x8, scoped, tag = 'scoped memory for tpu_custom_call.1']
    #allocation6 [shape = 'u8[65536]{0}', space=vmem, size = 0x10000, scoped, tag = 'input window, operand 1']
    #allocation7 [shape = 's32[2]{0}', space=sflag, size = 0x8, scoped, tag = 'scoped memory for tpu_custom_call.1']
    #allocation8 [shape = 'u8[32768]{0}', space=vmem, size = 0x8000, scoped, tag = 'input window, operand 2, single buffered']
    #allocation9 [shape = 'u8[65536]{0}', space=vmem, size = 0x10000, scoped, tag = 'output window, operand 0']
    #allocation10 [shape = 'u8[8192]{0}', space=vmem, size = 0x2000, scoped, tag = 'output window, operand 1']
    #allocation11 [shape = 's32[2]{0}', space=sflag, size = 0x8, scoped, tag = 'scoped memory for tpu_custom_call.1']
    %10 = vsyncpa [#allocation4], 0
    %s11 = scalar_lea.sflag [#allocation4], 1
    %12 = vsyncpa %s11, 0
    %13 = vsyncpa [#allocation7], 0
    %s14 = scalar_lea.sflag [#allocation7], 1
    %15 = vsyncpa %s14, 0
    %16 = vsyncpa [#allocation5], 0
    %s17 = scalar_lea.sflag [#allocation5], 1
    %18 = vsyncpa %s17, 0
    %19 = vsyncpa [#allocation11], 0
    %s20 = scalar_lea.sflag [#allocation11], 1
    %21 = vsyncpa %s20, 0
    loop: start=0, step=1, limit=18
    $region2: #{tpu_custom_call.1} parent=1 // loop_pre_header
      _
    $region3: #{tpu_custom_call.1} parent=1 // loop_header
      %s23 = sphi 0, %s27
      %p24 = scmp.ge.s32.totalorder %s23, 18
      %s30 = sphi 0, %s42
      %s31 = sphi 0, %s38
      %s32 = sphi 0, %s30
      %s33 = sphi 0, %s31
      %s34 = sphi 0, %s32
      %s35 = sphi 0, %s33
      %s47 = sphi 0, %s49
      %s50 = sphi 0, %s47
      %s51 = sphi 0, %s50
      %s67 = sphi 0, %s51
      %s73 = sphi 0, %s75
      %s76 = sphi 0, %s73
      %s77 = sphi 0, %s76
      %s93 = sphi 0, %s77
      %s97 = sphi 0, %s97
      %s99 = sphi 0, %s97
      %s100 = sphi 0, %s99
      %s114 = sphi 0, %s100
      %s120 = sphi 0, %s122
      %s123 = sphi 0, %s120
      %s124 = sphi 0, %s123
      %s140 = sphi 0, %s124
      %s146 = sphi 0, %s148
      %s149 = sphi 0, %s146
      %s150 = sphi 0, %s149
      %s166 = sphi 0, %s150
    $region4: #{tpu_custom_call.1} parent=1 // loop_header_branch
      %26 = sbr.rel (%p24) target = $region8
    $region5: #{tpu_custom_call.1} parent=1 // loop_body
      %s28 = ssub.s32 %s23, 1
      %s29 = ssub.s32 %s23, 2
      %s36 = sadd.s32 1, %s31
      %p37 = scmp.ge.s32.totalorder %s36, 4
      %s38 = scalar_select %p37, 0, %s36
      %s39 = sadd.s32 1, %s30
      %s40 = scalar_select %p37, %s39, %s30
      %p41 = scmp.ge.s32.totalorder %s40, 4
      %s42 = scalar_select %p41, 0, %s40
      %s43 = ssub.s32 %s30, %s42
      %s44 = ssub.s32 %s31, %s38
      %s45 = sor.u32 %s43, %s44
      %p46 = scmp.eq.s32.totalorder %s45, 0
      %s48 = sadd.s32 %s47, 1
      %s49 = scalar_select %p46, %s47, %s48
      %p52 = pneg %p46
      %p53 = scmp.eq.s32.totalorder %s23, 15
      %p54 = por %p52, %p53
      %p55 = scmp.ne.s32.totalorder %s47, %s50
      %p56 = scmp.eq.s32.totalorder %s23, 0
      %p57 = por %p55, %p56
      %p58 = scmp.ne.s32.totalorder %s47, %s50
      %p59 = scmp.eq.s32.totalorder %s28, 15
      %p60 = por %p58, %p59
      %p61 = scmp.ne.s32.totalorder %s50, %s51
      %p62 = scmp.eq.s32.totalorder %s28, 0
      %p63 = por %p61, %p62
      %p64 = scmp.ne.s32.totalorder %s50, %s51
      %p65 = scmp.eq.s32.totalorder %s29, 15
      %p66 = por %p64, %p65
      %p68 = scmp.ne.s32.totalorder %s51, %s67
      %p69 = scmp.eq.s32.totalorder %s29, 0
      %p70 = por %p68, %p69
      %s71 = ssub.s32 %s31, %s38
      %p72 = scmp.eq.s32.totalorder %s71, 0
      %s74 = sadd.s32 %s73, 1
      %s75 = scalar_select %p72, %s73, %s74
      %p78 = pneg %p72
      %p79 = scmp.eq.s32.totalorder %s23, 15
      %p80 = por %p78, %p79
      %p81 = scmp.ne.s32.totalorder %s73, %s76
      %p82 = scmp.eq.s32.totalorder %s23, 0
      %p83 = por %p81, %p82
      %p84 = scmp.ne.s32.totalorder %s73, %s76
      %p85 = scmp.eq.s32.totalorder %s28, 15
      %p86 = por %p84, %p85
      %p87 = scmp.ne.s32.totalorder %s76, %s77
      %p88 = scmp.eq.s32.totalorder %s28, 0
      %p89 = por %p87, %p88
      %p90 = scmp.ne.s32.totalorder %s76, %s77
      %p91 = scmp.eq.s32.totalorder %s29, 15
      %p92 = por %p90, %p91
      %p94 = scmp.ne.s32.totalorder %s77, %s93
      %p95 = scmp.eq.s32.totalorder %s29, 0
      %p96 = por %p94, %p95
      %s98 = sadd.s32 %s97, 1
      %p101 = scmp.eq.s32.totalorder %s23, 15
      %p102 = scmp.ne.s32.totalorder %s97, %s99
      %p103 = scmp.eq.s32.totalorder %s23, 0
      %p104 = por %p102, %p103
      %p105 = scmp.ne.s32.totalorder %s97, %s99
      %p106 = scmp.eq.s32.totalorder %s28, 15
      %p107 = por %p105, %p106
      %p108 = scmp.ne.s32.totalorder %s99, %s100
      %p109 = scmp.eq.s32.totalorder %s28, 0
      %p110 = por %p108, %p109
      %p111 = scmp.ne.s32.totalorder %s99, %s100
      %p112 = scmp.eq.s32.totalorder %s29, 15
      %p113 = por %p111, %p112
      %p115 = scmp.ne.s32.totalorder %s100, %s114
      %p116 = scmp.eq.s32.totalorder %s29, 0
      %p117 = por %p115, %p116
      %s118 = ssub.s32 %s30, %s42
      %p119 = scmp.eq.s32.totalorder %s118, 0
      %s121 = sadd.s32 %s120, 1
      %s122 = scalar_select %p119, %s120, %s121
      %p125 = pneg %p119
      %p126 = scmp.eq.s32.totalorder %s23, 15
      %p127 = por %p125, %p126
      %p128 = scmp.ne.s32.totalorder %s120, %s123
      %p129 = scmp.eq.s32.totalorder %s23, 0
      %p130 = por %p128, %p129
      %p131 = scmp.ne.s32.totalorder %s120, %s123
      %p132 = scmp.eq.s32.totalorder %s28, 15
      %p133 = por %p131, %p132
      %p134 = scmp.ne.s32.totalorder %s123, %s124
      %p135 = scmp.eq.s32.totalorder %s28, 0
      %p136 = por %p134, %p135
      %p137 = scmp.ne.s32.totalorder %s123, %s124
      %p138 = scmp.eq.s32.totalorder %s29, 15
      %p139 = por %p137, %p138
      %p141 = scmp.ne.s32.totalorder %s124, %s140
      %p142 = scmp.eq.s32.totalorder %s29, 0
      %p143 = por %p141, %p142
      %s144 = ssub.s32 %s30, %s42
      %p145 = scmp.eq.s32.totalorder %s144, 0
      %s147 = sadd.s32 %s146, 1
      %s148 = scalar_select %p145, %s146, %s147
      %p151 = pneg %p145
      %p152 = scmp.eq.s32.totalorder %s23, 15
      %p153 = por %p151, %p152
      %p154 = scmp.ne.s32.totalorder %s146, %s149
      %p155 = scmp.eq.s32.totalorder %s23, 0
      %p156 = por %p154, %p155
      %p157 = scmp.ne.s32.totalorder %s146, %s149
      %p158 = scmp.eq.s32.totalorder %s28, 15
      %p159 = por %p157, %p158
      %p160 = scmp.ne.s32.totalorder %s149, %s150
      %p161 = scmp.eq.s32.totalorder %s28, 0
      %p162 = por %p160, %p161
      %p163 = scmp.ne.s32.totalorder %s149, %s150
      %p164 = scmp.eq.s32.totalorder %s29, 15
      %p165 = por %p163, %p164
      %p167 = scmp.ne.s32.totalorder %s150, %s166
      %p168 = scmp.eq.s32.totalorder %s29, 0
      %p169 = por %p167, %p168
      %p170 = scmp.le.s32.totalorder 1, %s23
      %p171 = scmp.lt.s32.totalorder %s23, 17
      %p172 = pnand %p170, %p171
      %p173 = pneg %p172
      // Predicated region
      $region9: #{tpu_custom_call.1} parent=5 // pred_check
        _
      $region10: #{tpu_custom_call.1} parent=5 // pred_check_branch
        %175 = sbr.rel (%p172) target = $region12
      $region11: #{tpu_custom_call.1} parent=5 // pred_region
        %s176 = ssub.s32 %s23, 1
        // Predicated region
        $region13: #{tpu_custom_call.1} parent=11 // pred_check
          %p177 = pneg %p110
        $region14: #{tpu_custom_call.1} parent=11 // pred_check_branch
          %179 = sbr.rel (%p177) target = $region16
        $region15: #{tpu_custom_call.1} parent=11 // pred_region
          %s181 = ssub.s32 1024, 1024
          %182 = vsyncadd [#allocation7], %s181
          %s183 = sshll.u32 [#allocation8], 4
          %s184 = int_to_ptr.vmem [resolvable:$true] %s183
          %189 = dma.hbm_to_vmem [thread:$0]  %s2, 1024, %s184, [#allocation7], 64, 64, 4
        $region16: #{tpu_custom_call.1} parent=11 // pred_fallthru
          _
      $region12: #{tpu_custom_call.1} parent=5 // pred_fallthru
        _
      %p190 = scmp.lt.s32.totalorder %s23, 16
      // Predicated region
      $region17: #{tpu_custom_call.1} parent=5 // pred_check
        %p191 = pneg %p190
      $region18: #{tpu_custom_call.1} parent=5 // pred_check_branch
        %193 = sbr.rel (%p191) target = $region20
      $region19: #{tpu_custom_call.1} parent=5 // pred_region
        // Predicated region
        $region21: #{tpu_custom_call.1} parent=19 // pred_check
          %p194 = pneg %p57
        $region22: #{tpu_custom_call.1} parent=19 // pred_check_branch
          %196 = sbr.rel (%p194) target = $region24
        $region23: #{tpu_custom_call.1} parent=19 // pred_region
          %s197 = sand.u32 %s47, 1
          %s198 = scalar_lea.sflag [#allocation4], %s197
          %s199 = sand.u32 %s47, 1
          %s200 = smul.addr %s199, 64
          %s201 = scalar_lea.vmem [#allocation3], %s200
          %s202 = smul.u32 16, %s30
          %s204 = ssub.s32 1024, 1024
          %205 = vsyncadd %s198, %s204
          %s206 = smul.addr %s202, 4
          %s207 = sadd.s32 %s31, %s206
          %s208 = smul.addr %s207, 64
          %s209 = scalar_lea.hbm %s0, %s208
          %s210 = sshll.u32 %s201, 4
          %s211 = int_to_ptr.vmem [resolvable:$true] %s210
          %216 = dma.hbm_to_vmem [thread:$0]  %s209, 1024, %s211, %s198, 256, 64, 4
        $region24: #{tpu_custom_call.1} parent=19 // pred_fallthru
          _
        // Predicated region
        $region25: #{tpu_custom_call.1} parent=19 // pred_check
          %p217 = pneg %p83
        $region26: #{tpu_custom_call.1} parent=19 // pred_check_branch
          %219 = sbr.rel (%p217) target = $region28
        $region27: #{tpu_custom_call.1} parent=19 // pred_region
          %s220 = sand.u32 %s23, 1
          %s221 = scalar_lea.sflag [#allocation7], %s220
          %s222 = sand.u32 %s73, 1
          %s223 = smul.addr %s222, 64
          %s224 = scalar_lea.vmem [#allocation6], %s223
          %s225 = smul.u32 16, %s31
          %s227 = ssub.s32 1024, 1024
          %228 = vsyncadd %s221, %s227
          %s229 = smul.addr %s225, 64
          %s230 = scalar_lea.hbm %s1, %s229
          %s231 = sshll.u32 %s224, 4
          %s232 = int_to_ptr.vmem [resolvable:$true] %s231
          %237 = dma.hbm_to_vmem [thread:$0]  %s230, 1024, %s232, %s221, 64, 64, 4
        $region28: #{tpu_custom_call.1} parent=19 // pred_fallthru
          _
      $region20: #{tpu_custom_call.1} parent=5 // pred_fallthru
        _
      %p238 = scmp.le.s32.totalorder 1, %s23
      %p239 = scmp.lt.s32.totalorder %s23, 17
      %p240 = pnand %p238, %p239
      %p241 = pneg %p240
      // Predicated region
      $region29: #{tpu_custom_call.1} parent=5 // pred_check
        _
      $region30: #{tpu_custom_call.1} parent=5 // pred_check_branch
        %243 = sbr.rel (%p240) target = $region32
      $region31: #{tpu_custom_call.1} parent=5 // pred_region
        %s244 = ssub.s32 %s23, 1
        %s245 = sand.u32 %s50, 1
        %s246 = scalar_lea.sflag [#allocation4], %s245
        %s247 = sand.u32 %s50, 1
        %s248 = smul.addr %s247, 64
        %s249 = scalar_lea.vmem [#allocation3], %s248
        // Predicated region
        $region33: #{tpu_custom_call.1} parent=31 // pred_check
          %p250 = pneg %p63
        $region34: #{tpu_custom_call.1} parent=31 // pred_check_branch
          %252 = sbr.rel (%p250) target = $region36
        $region35: #{tpu_custom_call.1} parent=31 // pred_region
          %253 = dma.done %s246, 1024
        $region36: #{tpu_custom_call.1} parent=31 // pred_fallthru
          _
        %s254 = sand.u32 %s28, 1
        %s255 = scalar_lea.sflag [#allocation7], %s254
        %s256 = sand.u32 %s76, 1
        %s257 = smul.addr %s256, 64
        %s258 = scalar_lea.vmem [#allocation6], %s257
        // Predicated region
        $region37: #{tpu_custom_call.1} parent=31 // pred_check
          %p259 = pneg %p89
        $region38: #{tpu_custom_call.1} parent=31 // pred_check_branch
          %261 = sbr.rel (%p259) target = $region40
        $region39: #{tpu_custom_call.1} parent=31 // pred_region
          %262 = dma.done %s255, 1024
        $region40: #{tpu_custom_call.1} parent=31 // pred_fallthru
          _
        // Predicated region
        $region41: #{tpu_custom_call.1} parent=31 // pred_check
          %p263 = pneg %p110
        $region42: #{tpu_custom_call.1} parent=31 // pred_check_branch
          %265 = sbr.rel (%p263) target = $region44
        $region43: #{tpu_custom_call.1} parent=31 // pred_region
          %266 = dma.done [#allocation7], 1024
        $region44: #{tpu_custom_call.1} parent=31 // pred_fallthru
          _
        %s267 = sand.u32 %s50, 1
        %s268 = scalar_lea.sflag [#allocation4], %s267
        %s269 = sand.u32 %s50, 1
        %s270 = smul.addr %s269, 64
        %s271 = scalar_lea.vmem [#allocation3], %s270
        %p272 = pneg %p63
        %p273 = pneg %p60
        %s274 = sand.u32 %s28, 1
        %s275 = scalar_lea.sflag [#allocation7], %s274
        %s276 = sand.u32 %s76, 1
        %s277 = smul.addr %s276, 64
        %s278 = scalar_lea.vmem [#allocation6], %s277
        %p279 = pneg %p89
        %p280 = pneg %p86
        %p281 = pneg %p110
        %p282 = pneg %p107
        %p283 = pneg %p136
        %p284 = pneg %p133
        %s285 = sand.u32 %s123, 1
        %s286 = scalar_lea.sflag [#allocation5], %s285
        %s287 = sand.u32 %s123, 1
        %s288 = smul.addr %s287, 64
        %s289 = scalar_lea.vmem [#allocation9], %s288
        %p290 = pneg %p162
        %p291 = pneg %p159
        %s292 = sand.u32 %s149, 1
        %s293 = scalar_lea.sflag [#allocation11], %s292
        %s294 = sand.u32 %s149, 1
        %s295 = smul.addr %s294, 8
        %s296 = scalar_lea.vmem [#allocation10], %s295
        %s297 = smul.u32 16, %s32
        %s298 = smul.u32 16, %s33
        %s299 = smul.u32 16, %s32
        %p301 = scmp.eq.s32.totalorder %s33, 0
        // Predicated region
        $region45: #{tpu_custom_call.1} parent=31 // pred_check
          %p302 = pneg %p301
        $region46: #{tpu_custom_call.1} parent=31 // pred_check_branch
          %304 = sbr.rel (%p302) target = $region48
        $region47: #{tpu_custom_call.1} parent=31 // pred_region
          %305 = vst [vmem:[#allocation2] sm:$0xff] 0.0
          %306 = vst [vmem:[#allocation2 + $0x8] sm:$0xff] 0.0
          %307 = vst [vmem:[#allocation2 + $0x10] sm:$0xff] 0.0
          %308 = vst [vmem:[#allocation2 + $0x18] sm:$0xff] 0.0
          %309 = vst [vmem:[#allocation2 + $0x20] sm:$0xff] 0.0
          %310 = vst [vmem:[#allocation2 + $0x28] sm:$0xff] 0.0
          %311 = vst [vmem:[#allocation2 + $0x30] sm:$0xff] 0.0
          %312 = vst [vmem:[#allocation2 + $0x38] sm:$0xff] 0.0
          %313 = vst [vmem:[#allocation2 + $0x40] sm:$0xff] 0.0
          %314 = vst [vmem:[#allocation2 + $0x48] sm:$0xff] 0.0
          %315 = vst [vmem:[#allocation2 + $0x50] sm:$0xff] 0.0
          %316 = vst [vmem:[#allocation2 + $0x58] sm:$0xff] 0.0
          %317 = vst [vmem:[#allocation2 + $0x60] sm:$0xff] 0.0
          %318 = vst [vmem:[#allocation2 + $0x68] sm:$0xff] 0.0
          %319 = vst [vmem:[#allocation2 + $0x70] sm:$0xff] 0.0
          %320 = vst [vmem:[#allocation2 + $0x78] sm:$0xff] 0.0
        $region48: #{tpu_custom_call.1} parent=31 // pred_fallthru
          _
        %v321 = vld [vmem:[#allocation2] sm:$0xff]
        %v322 = vld [vmem:[#allocation2 + $0x8] sm:$0xff]
        %v323 = vld [vmem:[#allocation2 + $0x10] sm:$0xff]
        %v324 = vld [vmem:[#allocation2 + $0x18] sm:$0xff]
        %v325 = vld [vmem:[#allocation2 + $0x20] sm:$0xff]
        %v326 = vld [vmem:[#allocation2 + $0x28] sm:$0xff]
        %v327 = vld [vmem:[#allocation2 + $0x30] sm:$0xff]
        %v328 = vld [vmem:[#allocation2 + $0x38] sm:$0xff]
        %v329 = vld [vmem:[#allocation2 + $0x40] sm:$0xff]
        %v330 = vld [vmem:[#allocation2 + $0x48] sm:$0xff]
        %v331 = vld [vmem:[#allocation2 + $0x50] sm:$0xff]
        %v332 = vld [vmem:[#allocation2 + $0x58] sm:$0xff]
        %v333 = vld [vmem:[#allocation2 + $0x60] sm:$0xff]
        %v334 = vld [vmem:[#allocation2 + $0x68] sm:$0xff]
        %v335 = vld [vmem:[#allocation2 + $0x70] sm:$0xff]
        %v336 = vld [vmem:[#allocation2 + $0x78] sm:$0xff]
        %v337 = vld [vmem:[%s249] sm:$0xf]
        %v338 = vld [vmem:[%s249 + $0x4] sm:$0xf]
        %v339 = vld [vmem:[%s249 + $0x8] sm:$0xf]
        %v340 = vld [vmem:[%s249 + $0xc] sm:$0xf]
        %v341 = vld [vmem:[%s249 + $0x10] sm:$0xf]
        %v342 = vld [vmem:[%s249 + $0x14] sm:$0xf]
        %v343 = vld [vmem:[%s249 + $0x18] sm:$0xf]
        %v344 = vld [vmem:[%s249 + $0x1c] sm:$0xf]
        %v345 = vld [vmem:[%s249 + $0x20] sm:$0xf]
        %v346 = vld [vmem:[%s249 + $0x24] sm:$0xf]
        %v347 = vld [vmem:[%s249 + $0x28] sm:$0xf]
        %v348 = vld [vmem:[%s249 + $0x2c] sm:$0xf]
        %v349 = vld [vmem:[%s249 + $0x30] sm:$0xf]
        %v350 = vld [vmem:[%s249 + $0x34] sm:$0xf]
        %v351 = vld [vmem:[%s249 + $0x38] sm:$0xf]
        %v352 = vld [vmem:[%s249 + $0x3c] sm:$0xf]
        %v353 = vld [vmem:[%s258] sm:$0xf]
        %v354 = vld [vmem:[%s258 + $0x4] sm:$0xf]
        %v355 = vld [vmem:[%s258 + $0x8] sm:$0xf]
        %v356 = vld [vmem:[%s258 + $0xc] sm:$0xf]
        %v357 = vld [vmem:[%s258 + $0x10] sm:$0xf]
        %v358 = vld [vmem:[%s258 + $0x14] sm:$0xf]
        %v359 = vld [vmem:[%s258 + $0x18] sm:$0xf]
        %v360 = vld [vmem:[%s258 + $0x1c] sm:$0xf]
        %v361 = vld [vmem:[%s258 + $0x20] sm:$0xf]
        %v362 = vld [vmem:[%s258 + $0x24] sm:$0xf]
        %v363 = vld [vmem:[%s258 + $0x28] sm:$0xf]
        %v364 = vld [vmem:[%s258 + $0x2c] sm:$0xf]
        %v365 = vld [vmem:[%s258 + $0x30] sm:$0xf]
        %v366 = vld [vmem:[%s258 + $0x34] sm:$0xf]
        %v367 = vld [vmem:[%s258 + $0x38] sm:$0xf]
        %v368 = vld [vmem:[%s258 + $0x3c] sm:$0xf]
        %v385 = vunpack.c.l.b16 %v337
        %v386 = vunpack.c.l.b16 %v338
        %v387 = vunpack.c.l.b16 %v339
        %v388 = vunpack.c.l.b16 %v340
        %v389 = vunpack.c.l.b16 %v341
        %v390 = vunpack.c.l.b16 %v342
        %v391 = vunpack.c.l.b16 %v343
        %v392 = vunpack.c.l.b16 %v344
        %v393 = vunpack.c.l.b16 %v345
        %v394 = vunpack.c.l.b16 %v346
        %v395 = vunpack.c.l.b16 %v347
        %v396 = vunpack.c.l.b16 %v348
        %v397 = vunpack.c.l.b16 %v349
        %v398 = vunpack.c.l.b16 %v350
        %v399 = vunpack.c.l.b16 %v351
        %v400 = vunpack.c.l.b16 %v352
        %v401 = vpack.c.b16 %v386, %v385
        %v402 = vpack.c.b16 %v388, %v387
        %v403 = vpack.c.b16 %v390, %v389
        %v404 = vpack.c.b16 %v392, %v391
        %v405 = vpack.c.b16 %v394, %v393
        %v406 = vpack.c.b16 %v396, %v395
        %v407 = vpack.c.b16 %v398, %v397
        %v408 = vpack.c.b16 %v400, %v399
        %v433 = vunpack.c.l.b16 %v353
        %v434 = vunpack.c.l.b16 %v354
        %v435 = vunpack.c.l.b16 %v355
        %v436 = vunpack.c.l.b16 %v356
        %v437 = vunpack.c.l.b16 %v357
        %v438 = vunpack.c.l.b16 %v358
        %v439 = vunpack.c.l.b16 %v359
        %v440 = vunpack.c.l.b16 %v360
        %v441 = vunpack.c.l.b16 %v361
        %v442 = vunpack.c.l.b16 %v362
        %v443 = vunpack.c.l.b16 %v363
        %v444 = vunpack.c.l.b16 %v364
        %v445 = vunpack.c.l.b16 %v365
        %v446 = vunpack.c.l.b16 %v366
        %v447 = vunpack.c.l.b16 %v367
        %v448 = vunpack.c.l.b16 %v368
        %v449 = vpack.c.b16 %v434, %v433
        %v450 = vpack.c.b16 %v436, %v435
        %v451 = vpack.c.b16 %v438, %v437
        %v452 = vpack.c.b16 %v440, %v439
        %v453 = vpack.c.b16 %v442, %v441
        %v454 = vpack.c.b16 %v444, %v443
        %v455 = vpack.c.b16 %v446, %v445
        %v456 = vpack.c.b16 %v448, %v447
        %465 = vmatprep.subr.bf16.mxu0 0
        %466 = vmatpush1.bf16.msra.mxu0 %v449
        %467 = vmatprep.subr.bf16.mxu0 0
        %468 = vmatpush1.bf16.msra.mxu0 %v450
        %469 = vmatprep.subr.bf16.mxu0 0
        %470 = vmatpush1.bf16.msra.mxu0 %v451
        %471 = vmatprep.subr.bf16.mxu0 0
        %472 = vmatpush1.bf16.msra.mxu0 %v452
        %473 = vmatprep.subr.bf16.mxu0 0
        %474 = vmatpush1.bf16.msra.mxu0 %v453
        %475 = vmatprep.subr.bf16.mxu0 0
        %476 = vmatpush1.bf16.msra.mxu0 %v454
        %477 = vmatprep.subr.bf16.mxu0 0
        %478 = vmatpush1.bf16.msra.mxu0 %v455
        %479 = vmatprep.subr.bf16.mxu0 0
        %480 = vmatpush1.bf16.msra.mxu0 %v456
        %481 = vmatprep.subr.bf16.mxu0 0
        %482 = vmatpush1.bf16.msra.mxu0 0
        %483 = vmatprep.subr.bf16.mxu0 0
        %484 = vmatpush1.bf16.msra.mxu0 0
        %485 = vmatprep.subr.bf16.mxu0 0
        %486 = vmatpush1.bf16.msra.mxu0 0
        %487 = vmatprep.subr.bf16.mxu0 0
        %488 = vmatpush1.bf16.msra.mxu0 0
        %489 = vmatprep.subr.bf16.mxu0 0
        %490 = vmatpush1.bf16.msra.mxu0 0
        %491 = vmatprep.subr.bf16.mxu0 0
        %492 = vmatpush1.bf16.msra.mxu0 0
        %493 = vmatprep.subr.bf16.mxu0 0
        %494 = vmatpush1.bf16.msra.mxu0 0
        %495 = vmatprep.subr.bf16.mxu0 0
        %496 = vmatpush1.bf16.msra.mxu0 0
        %497 = vmatprep.mubr.bf16.mxu0 0
        %498 = vmatmul.mubr.bf16.gmra.mrb[0].mxu0 %v401
        %v499 = vpop.f32.mrb[0].mxu0
        %v500 = vadd.f32 0.0, %v499
        %v501 = vpop.f32.mrb[0].mxu0
        %v502 = vpop.f32.mrb[0].mxu0
        %v503 = vadd.f32 0.0, %v502
        %v504 = vpop.f32.mrb[0].mxu0
        %505 = vmatprep.mubr.bf16.mxu0 0
        %506 = vmatmul.mubr.bf16.gmra.mrb[0].mxu0 %v402
        %v507 = vpop.f32.mrb[0].mxu0
        %v508 = vadd.f32 0.0, %v507
        %v509 = vpop.f32.mrb[0].mxu0
        %v510 = vpop.f32.mrb[0].mxu0
        %v511 = vadd.f32 0.0, %v510
        %v512 = vpop.f32.mrb[0].mxu0
        %513 = vmatprep.mubr.bf16.mxu0 0
        %514 = vmatmul.mubr.bf16.gmra.mrb[0].mxu0 %v403
        %v515 = vpop.f32.mrb[0].mxu0
        %v516 = vadd.f32 0.0, %v515
        %v517 = vpop.f32.mrb[0].mxu0
        %v518 = vpop.f32.mrb[0].mxu0
        %v519 = vadd.f32 0.0, %v518
        %v520 = vpop.f32.mrb[0].mxu0
        %521 = vmatprep.mubr.bf16.mxu0 0
        %522 = vmatmul.mubr.bf16.gmra.mrb[0].mxu0 %v404
        %v523 = vpop.f32.mrb[0].mxu0
        %v524 = vadd.f32 0.0, %v523
        %v525 = vpop.f32.mrb[0].mxu0
        %v526 = vpop.f32.mrb[0].mxu0
        %v527 = vadd.f32 0.0, %v526
        %v528 = vpop.f32.mrb[0].mxu0
        %529 = vmatprep.mubr.bf16.mxu0 0
        %530 = vmatmul.mubr.bf16.gmra.mrb[0].mxu0 %v405
        %v531 = vpop.f32.mrb[0].mxu0
        %v532 = vadd.f32 0.0, %v531
        %v533 = vpop.f32.mrb[0].mxu0
        %v534 = vpop.f32.mrb[0].mxu0
        %v535 = vadd.f32 0.0, %v534
        %v536 = vpop.f32.mrb[0].mxu0
        %537 = vmatprep.mubr.bf16.mxu0 0
        %538 = vmatmul.mubr.bf16.gmra.mrb[0].mxu0 %v406
        %v539 = vpop.f32.mrb[0].mxu0
        %v540 = vadd.f32 0.0, %v539
        %v541 = vpop.f32.mrb[0].mxu0
        %v542 = vpop.f32.mrb[0].mxu0
        %v543 = vadd.f32 0.0, %v542
        %v544 = vpop.f32.mrb[0].mxu0
        %545 = vmatprep.mubr.bf16.mxu0 0
        %546 = vmatmul.mubr.bf16.gmra.mrb[0].mxu0 %v407
        %v547 = vpop.f32.mrb[0].mxu0
        %v548 = vadd.f32 0.0, %v547
        %v549 = vpop.f32.mrb[0].mxu0
        %v550 = vpop.f32.mrb[0].mxu0
        %v551 = vadd.f32 0.0, %v550
        %v552 = vpop.f32.mrb[0].mxu0
        %553 = vmatprep.mubr.bf16.mxu0 0
        %554 = vmatmul.mubr.bf16.gmra.mrb[0].mxu0 %v408
        %v555 = vpop.f32.mrb[0].mxu0
        %v556 = vadd.f32 0.0, %v555
        %v557 = vpop.f32.mrb[0].mxu0
        %v558 = vpop.f32.mrb[0].mxu0
        %v559 = vadd.f32 0.0, %v558
        %v560 = vpop.f32.mrb[0].mxu0
        %561 = vdwg.mxu0
        %v562 = vadd.f32 %v321, %v500
        %v563 = vadd.f32 %v322, %v503
        %v564 = vadd.f32 %v323, %v508
        %v565 = vadd.f32 %v324, %v511
        %v566 = vadd.f32 %v325, %v516
        %v567 = vadd.f32 %v326, %v519
        %v568 = vadd.f32 %v327, %v524
        %v569 = vadd.f32 %v328, %v527
        %v570 = vadd.f32 %v329, %v532
        %v571 = vadd.f32 %v330, %v535
        %v572 = vadd.f32 %v331, %v540
        %v573 = vadd.f32 %v332, %v543
        %v574 = vadd.f32 %v333, %v548
        %v575 = vadd.f32 %v334, %v551
        %v576 = vadd.f32 %v335, %v556
        %v577 = vadd.f32 %v336, %v559
        %578 = vst [vmem:[#allocation2] sm:$0xff] %v562
        %579 = vst [vmem:[#allocation2 + $0x8] sm:$0xff] %v563
        %580 = vst [vmem:[#allocation2 + $0x10] sm:$0xff] %v564
        %581 = vst [vmem:[#allocation2 + $0x18] sm:$0xff] %v565
        %582 = vst [vmem:[#allocation2 + $0x20] sm:$0xff] %v566
        %583 = vst [vmem:[#allocation2 + $0x28] sm:$0xff] %v567
        %584 = vst [vmem:[#allocation2 + $0x30] sm:$0xff] %v568
        %585 = vst [vmem:[#allocation2 + $0x38] sm:$0xff] %v569
        %586 = vst [vmem:[#allocation2 + $0x40] sm:$0xff] %v570
        %587 = vst [vmem:[#allocation2 + $0x48] sm:$0xff] %v571
        %588 = vst [vmem:[#allocation2 + $0x50] sm:$0xff] %v572
        %589 = vst [vmem:[#allocation2 + $0x58] sm:$0xff] %v573
        %590 = vst [vmem:[#allocation2 + $0x60] sm:$0xff] %v574
        %591 = vst [vmem:[#allocation2 + $0x68] sm:$0xff] %v575
        %592 = vst [vmem:[#allocation2 + $0x70] sm:$0xff] %v576
        %593 = vst [vmem:[#allocation2 + $0x78] sm:$0xff] %v577
        %p594 = scmp.eq.s32.totalorder %s33, %s32
        // Predicated region
        $region49: #{tpu_custom_call.1} parent=31 // pred_check
          %p595 = pneg %p594
        $region50: #{tpu_custom_call.1} parent=31 // pred_check_branch
          %597 = sbr.rel (%p595) target = $region52
        $region51: #{tpu_custom_call.1} parent=31 // pred_region
          %v598 = vld [vmem:[#allocation2] sm:$0xff]
          %v599 = vld [vmem:[#allocation2 + $0x8] sm:$0xff]
          %v600 = vld [vmem:[#allocation2 + $0x10] sm:$0xff]
          %v601 = vld [vmem:[#allocation2 + $0x18] sm:$0xff]
          %v602 = vld [vmem:[#allocation2 + $0x20] sm:$0xff]
          %v603 = vld [vmem:[#allocation2 + $0x28] sm:$0xff]
          %v604 = vld [vmem:[#allocation2 + $0x30] sm:$0xff]
          %v605 = vld [vmem:[#allocation2 + $0x38] sm:$0xff]
          %v606 = vld [vmem:[#allocation2 + $0x40] sm:$0xff]
          %v607 = vld [vmem:[#allocation2 + $0x48] sm:$0xff]
          %v608 = vld [vmem:[#allocation2 + $0x50] sm:$0xff]
          %v609 = vld [vmem:[#allocation2 + $0x58] sm:$0xff]
          %v610 = vld [vmem:[#allocation2 + $0x60] sm:$0xff]
          %v611 = vld [vmem:[#allocation2 + $0x68] sm:$0xff]
          %v612 = vld [vmem:[#allocation2 + $0x70] sm:$0xff]
          %v613 = vld [vmem:[#allocation2 + $0x78] sm:$0xff]
          %v614 = vld [vmem:[%s258] sm:$0xf]
          %v615 = vld [vmem:[%s258 + $0x4] sm:$0xf]
          %v616 = vld [vmem:[%s258 + $0x8] sm:$0xf]
          %v617 = vld [vmem:[%s258 + $0xc] sm:$0xf]
          %v618 = vld [vmem:[%s258 + $0x10] sm:$0xf]
          %v619 = vld [vmem:[%s258 + $0x14] sm:$0xf]
          %v620 = vld [vmem:[%s258 + $0x18] sm:$0xf]
          %v621 = vld [vmem:[%s258 + $0x1c] sm:$0xf]
          %v622 = vld [vmem:[%s258 + $0x20] sm:$0xf]
          %v623 = vld [vmem:[%s258 + $0x24] sm:$0xf]
          %v624 = vld [vmem:[%s258 + $0x28] sm:$0xf]
          %v625 = vld [vmem:[%s258 + $0x2c] sm:$0xf]
          %v626 = vld [vmem:[%s258 + $0x30] sm:$0xf]
          %v627 = vld [vmem:[%s258 + $0x34] sm:$0xf]
          %v628 = vld [vmem:[%s258 + $0x38] sm:$0xf]
          %v629 = vld [vmem:[%s258 + $0x3c] sm:$0xf]
          %v630 = vunpack.c.l.bf16 %v614
          %v631 = vunpack.c.l.bf16 %v615
          %v632 = vunpack.c.l.bf16 %v616
          %v633 = vunpack.c.l.bf16 %v617
          %v634 = vunpack.c.l.bf16 %v618
          %v635 = vunpack.c.l.bf16 %v619
          %v636 = vunpack.c.l.bf16 %v620
          %v637 = vunpack.c.l.bf16 %v621
          %v638 = vunpack.c.l.bf16 %v622
          %v639 = vunpack.c.l.bf16 %v623
          %v640 = vunpack.c.l.bf16 %v624
          %v641 = vunpack.c.l.bf16 %v625
          %v642 = vunpack.c.l.bf16 %v626
          %v643 = vunpack.c.l.bf16 %v627
          %v644 = vunpack.c.l.bf16 %v628
          %v645 = vunpack.c.l.bf16 %v629
          %v646 = vadd.f32 %v598, %v630
          %v647 = vadd.f32 %v599, %v631
          %v648 = vadd.f32 %v600, %v632
          %v649 = vadd.f32 %v601, %v633
          %v650 = vadd.f32 %v602, %v634
          %v651 = vadd.f32 %v603, %v635
          %v652 = vadd.f32 %v604, %v636
          %v653 = vadd.f32 %v605, %v637
          %v654 = vadd.f32 %v606, %v638
          %v655 = vadd.f32 %v607, %v639
          %v656 = vadd.f32 %v608, %v640
          %v657 = vadd.f32 %v609, %v641
          %v658 = vadd.f32 %v610, %v642
          %v659 = vadd.f32 %v611, %v643
          %v660 = vadd.f32 %v612, %v644
          %v661 = vadd.f32 %v613, %v645
          %662 = vst [vmem:[#allocation2] sm:$0xff] %v646
          %663 = vst [vmem:[#allocation2 + $0x8] sm:$0xff] %v647
          %664 = vst [vmem:[#allocation2 + $0x10] sm:$0xff] %v648
          %665 = vst [vmem:[#allocation2 + $0x18] sm:$0xff] %v649
          %666 = vst [vmem:[#allocation2 + $0x20] sm:$0xff] %v650
          %667 = vst [vmem:[#allocation2 + $0x28] sm:$0xff] %v651
          %668 = vst [vmem:[#allocation2 + $0x30] sm:$0xff] %v652
          %669 = vst [vmem:[#allocation2 + $0x38] sm:$0xff] %v653
          %670 = vst [vmem:[#allocation2 + $0x40] sm:$0xff] %v654
          %671 = vst [vmem:[#allocation2 + $0x48] sm:$0xff] %v655
          %672 = vst [vmem:[#allocation2 + $0x50] sm:$0xff] %v656
          %673 = vst [vmem:[#allocation2 + $0x58] sm:$0xff] %v657
          %674 = vst [vmem:[#allocation2 + $0x60] sm:$0xff] %v658
          %675 = vst [vmem:[#allocation2 + $0x68] sm:$0xff] %v659
          %676 = vst [vmem:[#allocation2 + $0x70] sm:$0xff] %v660
          %677 = vst [vmem:[#allocation2 + $0x78] sm:$0xff] %v661
        $region52: #{tpu_custom_call.1} parent=31 // pred_fallthru
          _
        %p678 = scmp.eq.s32.totalorder %s33, 3
        // Predicated region
        $region53: #{tpu_custom_call.1} parent=31 // pred_check
          %p679 = pneg %p678
        $region54: #{tpu_custom_call.1} parent=31 // pred_check_branch
          %681 = sbr.rel (%p679) target = $region56
        $region55: #{tpu_custom_call.1} parent=31 // pred_region
          %v682 = vld [vmem:[#allocation2] sm:$0xff]
          %v683 = vld [vmem:[#allocation2 + $0x8] sm:$0xff]
          %v684 = vld [vmem:[#allocation2 + $0x10] sm:$0xff]
          %v685 = vld [vmem:[#allocation2 + $0x18] sm:$0xff]
          %v686 = vld [vmem:[#allocation2 + $0x20] sm:$0xff]
          %v687 = vld [vmem:[#allocation2 + $0x28] sm:$0xff]
          %v688 = vld [vmem:[#allocation2 + $0x30] sm:$0xff]
          %v689 = vld [vmem:[#allocation2 + $0x38] sm:$0xff]
          %v690 = vld [vmem:[#allocation2 + $0x40] sm:$0xff]
          %v691 = vld [vmem:[#allocation2 + $0x48] sm:$0xff]
          %v692 = vld [vmem:[#allocation2 + $0x50] sm:$0xff]
          %v693 = vld [vmem:[#allocation2 + $0x58] sm:$0xff]
          %v694 = vld [vmem:[#allocation2 + $0x60] sm:$0xff]
          %v695 = vld [vmem:[#allocation2 + $0x68] sm:$0xff]
          %v696 = vld [vmem:[#allocation2 + $0x70] sm:$0xff]
          %v697 = vld [vmem:[#allocation2 + $0x78] sm:$0xff]
          %v698 = vpack.c.bf16 %v683, %v682
          %v699 = vpack.c.bf16 %v685, %v684
          %v700 = vpack.c.bf16 %v687, %v686
          %v701 = vpack.c.bf16 %v689, %v688
          %v702 = vpack.c.bf16 %v691, %v690
          %v703 = vpack.c.bf16 %v693, %v692
          %v704 = vpack.c.bf16 %v695, %v694
          %v705 = vpack.c.bf16 %v697, %v696
          %v706 = vld [vmem:[#allocation8] sm:$0xf]
          %v707 = vld [vmem:[#allocation8 + $0x4] sm:$0xf]
          %v708 = vld [vmem:[#allocation8 + $0x8] sm:$0xf]
          %v709 = vld [vmem:[#allocation8 + $0xc] sm:$0xf]
          %v710 = vld [vmem:[#allocation8 + $0x10] sm:$0xf]
          %v711 = vld [vmem:[#allocation8 + $0x14] sm:$0xf]
          %v712 = vld [vmem:[#allocation8 + $0x18] sm:$0xf]
          %v713 = vld [vmem:[#allocation8 + $0x1c] sm:$0xf]
          %v714 = vld [vmem:[#allocation8 + $0x20] sm:$0xf]
          %v715 = vld [vmem:[#allocation8 + $0x24] sm:$0xf]
          %v716 = vld [vmem:[#allocation8 + $0x28] sm:$0xf]
          %v717 = vld [vmem:[#allocation8 + $0x2c] sm:$0xf]
          %v718 = vld [vmem:[#allocation8 + $0x30] sm:$0xf]
          %v719 = vld [vmem:[#allocation8 + $0x34] sm:$0xf]
          %v720 = vld [vmem:[#allocation8 + $0x38] sm:$0xf]
          %v721 = vld [vmem:[#allocation8 + $0x3c] sm:$0xf]
          %v738 = vunpack.c.l.b16 %v706
          %v739 = vunpack.c.l.b16 %v707
          %v740 = vunpack.c.l.b16 %v708
          %v741 = vunpack.c.l.b16 %v709
          %v742 = vunpack.c.l.b16 %v710
          %v743 = vunpack.c.l.b16 %v711
          %v744 = vunpack.c.l.b16 %v712
          %v745 = vunpack.c.l.b16 %v713
          %v746 = vunpack.c.l.b16 %v714
          %v747 = vunpack.c.l.b16 %v715
          %v748 = vunpack.c.l.b16 %v716
          %v749 = vunpack.c.l.b16 %v717
          %v750 = vunpack.c.l.b16 %v718
          %v751 = vunpack.c.l.b16 %v719
          %v752 = vunpack.c.l.b16 %v720
          %v753 = vunpack.c.l.b16 %v721
          %v754 = vpack.c.b16 %v739, %v738
          %v755 = vpack.c.b16 %v741, %v740
          %v756 = vpack.c.b16 %v743, %v742
          %v757 = vpack.c.b16 %v745, %v744
          %v758 = vpack.c.b16 %v747, %v746
          %v759 = vpack.c.b16 %v749, %v748
          %v760 = vpack.c.b16 %v751, %v750
          %v761 = vpack.c.b16 %v753, %v752
          %770 = vmatprep.subr.bf16.mxu0 0
          %771 = vmatpush1.bf16.msra.mxu0 %v754
          %772 = vmatprep.subr.bf16.mxu0 0
          %773 = vmatpush1.bf16.msra.mxu0 %v755
          %774 = vmatprep.subr.bf16.mxu0 0
          %775 = vmatpush1.bf16.msra.mxu0 %v756
          %776 = vmatprep.subr.bf16.mxu0 0
          %777 = vmatpush1.bf16.msra.mxu0 %v757
          %778 = vmatprep.subr.bf16.mxu0 0
          %779 = vmatpush1.bf16.msra.mxu0 %v758
          %780 = vmatprep.subr.bf16.mxu0 0
          %781 = vmatpush1.bf16.msra.mxu0 %v759
          %782 = vmatprep.subr.bf16.mxu0 0
          %783 = vmatpush1.bf16.msra.mxu0 %v760
          %784 = vmatprep.subr.bf16.mxu0 0
          %785 = vmatpush1.bf16.msra.mxu0 %v761
          %786 = vmatprep.subr.bf16.mxu0 0
          %787 = vmatpush1.bf16.msra.mxu0 0
          %788 = vmatprep.subr.bf16.mxu0 0
          %789 = vmatpush1.bf16.msra.mxu0 0
          %790 = vmatprep.subr.bf16.mxu0 0
          %791 = vmatpush1.bf16.msra.mxu0 0
          %792 = vmatprep.subr.bf16.mxu0 0
          %793 = vmatpush1.bf16.msra.mxu0 0
          %794 = vmatprep.subr.bf16.mxu0 0
          %795 = vmatpush1.bf16.msra.mxu0 0
          %796 = vmatprep.subr.bf16.mxu0 0
          %797 = vmatpush1.bf16.msra.mxu0 0
          %798 = vmatprep.subr.bf16.mxu0 0
          %799 = vmatpush1.bf16.msra.mxu0 0
          %800 = vmatprep.subr.bf16.mxu0 0
          %801 = vmatpush1.bf16.msra.mxu0 0
          %802 = vmatprep.mubr.bf16.mxu0 0
          %803 = vmatmul.mubr.bf16.gmra.mrb[0].mxu0 %v698
          %v804 = vpop.f32.mrb[0].mxu0
          %v805 = vadd.f32 0.0, %v804
          %v806 = vpop.f32.mrb[0].mxu0
          %v807 = vpop.f32.mrb[0].mxu0
          %v808 = vadd.f32 0.0, %v807
          %v809 = vpop.f32.mrb[0].mxu0
          %810 = vmatprep.mubr.bf16.mxu0 0
          %811 = vmatmul.mubr.bf16.gmra.mrb[0].mxu0 %v699
          %v812 = vpop.f32.mrb[0].mxu0
          %v813 = vadd.f32 0.0, %v812
          %v814 = vpop.f32.mrb[0].mxu0
          %v815 = vpop.f32.mrb[0].mxu0
          %v816 = vadd.f32 0.0, %v815
          %v817 = vpop.f32.mrb[0].mxu0
          %818 = vmatprep.mubr.bf16.mxu0 0
          %819 = vmatmul.mubr.bf16.gmra.mrb[0].mxu0 %v700
          %v820 = vpop.f32.mrb[0].mxu0
          %v821 = vadd.f32 0.0, %v820
          %v822 = vpop.f32.mrb[0].mxu0
          %v823 = vpop.f32.mrb[0].mxu0
          %v824 = vadd.f32 0.0, %v823
          %v825 = vpop.f32.mrb[0].mxu0
          %826 = vmatprep.mubr.bf16.mxu0 0
          %827 = vmatmul.mubr.bf16.gmra.mrb[0].mxu0 %v701
          %v828 = vpop.f32.mrb[0].mxu0
          %v829 = vadd.f32 0.0, %v828
          %v830 = vpop.f32.mrb[0].mxu0
          %v831 = vpop.f32.mrb[0].mxu0
          %v832 = vadd.f32 0.0, %v831
          %v833 = vpop.f32.mrb[0].mxu0
          %834 = vmatprep.mubr.bf16.mxu0 0
          %835 = vmatmul.mubr.bf16.gmra.mrb[0].mxu0 %v702
          %v836 = vpop.f32.mrb[0].mxu0
          %v837 = vadd.f32 0.0, %v836
          %v838 = vpop.f32.mrb[0].mxu0
          %v839 = vpop.f32.mrb[0].mxu0
          %v840 = vadd.f32 0.0, %v839
          %v841 = vpop.f32.mrb[0].mxu0
          %842 = vmatprep.mubr.bf16.mxu0 0
          %843 = vmatmul.mubr.bf16.gmra.mrb[0].mxu0 %v703
          %v844 = vpop.f32.mrb[0].mxu0
          %v845 = vadd.f32 0.0, %v844
          %v846 = vpop.f32.mrb[0].mxu0
          %v847 = vpop.f32.mrb[0].mxu0
          %v848 = vadd.f32 0.0, %v847
          %v849 = vpop.f32.mrb[0].mxu0
          %850 = vmatprep.mubr.bf16.mxu0 0
          %851 = vmatmul.mubr.bf16.gmra.mrb[0].mxu0 %v704
          %v852 = vpop.f32.mrb[0].mxu0
          %v853 = vadd.f32 0.0, %v852
          %v854 = vpop.f32.mrb[0].mxu0
          %v855 = vpop.f32.mrb[0].mxu0
          %v856 = vadd.f32 0.0, %v855
          %v857 = vpop.f32.mrb[0].mxu0
          %858 = vmatprep.mubr.bf16.mxu0 0
          %859 = vmatmul.mubr.bf16.gmra.mrb[0].mxu0 %v705
          %v860 = vpop.f32.mrb[0].mxu0
          %v861 = vadd.f32 0.0, %v860
          %v862 = vpop.f32.mrb[0].mxu0
          %v863 = vpop.f32.mrb[0].mxu0
          %v864 = vadd.f32 0.0, %v863
          %v865 = vpop.f32.mrb[0].mxu0
          %866 = vdwg.mxu0
          %v867 = vpack.c.bf16 %v808, %v805
          %v868 = vpack.c.bf16 %v816, %v813
          %v869 = vpack.c.bf16 %v824, %v821
          %v870 = vpack.c.bf16 %v832, %v829
          %v871 = vpack.c.bf16 %v840, %v837
          %v872 = vpack.c.bf16 %v848, %v845
          %v873 = vpack.c.bf16 %v856, %v853
          %v874 = vpack.c.bf16 %v864, %v861
          %v883 = vunpack.c.l.b16 %v867
          %v884 = vunpack.c.h.b16 %v867
          %v885 = vunpack.c.l.b16 %v868
          %v886 = vunpack.c.h.b16 %v868
          %v887 = vunpack.c.l.b16 %v869
          %v888 = vunpack.c.h.b16 %v869
          %v889 = vunpack.c.l.b16 %v870
          %v890 = vunpack.c.h.b16 %v870
          %v891 = vunpack.c.l.b16 %v871
          %v892 = vunpack.c.h.b16 %v871
          %v893 = vunpack.c.l.b16 %v872
          %v894 = vunpack.c.h.b16 %v872
          %v895 = vunpack.c.l.b16 %v873
          %v896 = vunpack.c.h.b16 %v873
          %v897 = vunpack.c.l.b16 %v874
          %v898 = vunpack.c.h.b16 %v874
          %v899 = vpack.c.b16 %v883, %v883
          %v900 = vpack.c.b16 %v884, %v884
          %v901 = vpack.c.b16 %v885, %v885
          %v902 = vpack.c.b16 %v886, %v886
          %v903 = vpack.c.b16 %v887, %v887
          %v904 = vpack.c.b16 %v888, %v888
          %v905 = vpack.c.b16 %v889, %v889
          %v906 = vpack.c.b16 %v890, %v890
          %v907 = vpack.c.b16 %v891, %v891
          %v908 = vpack.c.b16 %v892, %v892
          %v909 = vpack.c.b16 %v893, %v893
          %v910 = vpack.c.b16 %v894, %v894
          %v911 = vpack.c.b16 %v895, %v895
          %v912 = vpack.c.b16 %v896, %v896
          %v913 = vpack.c.b16 %v897, %v897
          %v914 = vpack.c.b16 %v898, %v898
          %931 = vst [vmem:[%s289] sm:$0xf] %v899
          %932 = vst [vmem:[%s289 + $0x4] sm:$0xf] %v900
          %933 = vst [vmem:[%s289 + $0x8] sm:$0xf] %v901
          %934 = vst [vmem:[%s289 + $0xc] sm:$0xf] %v902
          %935 = vst [vmem:[%s289 + $0x10] sm:$0xf] %v903
          %936 = vst [vmem:[%s289 + $0x14] sm:$0xf] %v904
          %937 = vst [vmem:[%s289 + $0x18] sm:$0xf] %v905
          %938 = vst [vmem:[%s289 + $0x1c] sm:$0xf] %v906
          %939 = vst [vmem:[%s289 + $0x20] sm:$0xf] %v907
          %940 = vst [vmem:[%s289 + $0x24] sm:$0xf] %v908
          %941 = vst [vmem:[%s289 + $0x28] sm:$0xf] %v909
          %942 = vst [vmem:[%s289 + $0x2c] sm:$0xf] %v910
          %943 = vst [vmem:[%s289 + $0x30] sm:$0xf] %v911
          %944 = vst [vmem:[%s289 + $0x34] sm:$0xf] %v912
          %945 = vst [vmem:[%s289 + $0x38] sm:$0xf] %v913
          %946 = vst [vmem:[%s289 + $0x3c] sm:$0xf] %v914
          %947 = vst [vmem:[%s296] sm:$0xff] 0.0
          %v948 = vadd.f32 %v805, %v808
          %v949 = vadd.f32 %v948, %v813
          %v950 = vadd.f32 %v949, %v816
          %v951 = vadd.f32 %v950, %v821
          %v952 = vadd.f32 %v951, %v824
          %v953 = vadd.f32 %v952, %v829
          %v954 = vadd.f32 %v953, %v832
          %v955 = vadd.f32 %v954, %v837
          %v956 = vadd.f32 %v955, %v840
          %v957 = vadd.f32 %v956, %v845
          %v958 = vadd.f32 %v957, %v848
          %v959 = vadd.f32 %v958, %v853
          %v960 = vadd.f32 %v959, %v856
          %v961 = vadd.f32 %v960, %v861
          %v962 = vadd.f32 %v961, %v864
          %v963 = vrot.slane %v962, 4
          %v964 = vadd.f32 %v962, %v963
          %v965 = vrot.slane %v964, 2
          %v966 = vadd.f32 %v964, %v965
          %v967 = vrot.slane %v966, 1
          %v968 = vadd.f32 %v966, %v967
          %969 = vst [vmem:[%s296] sm:$0x1] %v968
          %v970 = vmul.f32 %v805, %v805
          %v971 = vmul.f32 %v808, %v808
          %v972 = vmul.f32 %v813, %v813
          %v973 = vmul.f32 %v816, %v816
          %v974 = vmul.f32 %v821, %v821
          %v975 = vmul.f32 %v824, %v824
          %v976 = vmul.f32 %v829, %v829
          %v977 = vmul.f32 %v832, %v832
          %v978 = vmul.f32 %v837, %v837
          %v979 = vmul.f32 %v840, %v840
          %v980 = vmul.f32 %v845, %v845
          %v981 = vmul.f32 %v848, %v848
          %v982 = vmul.f32 %v853, %v853
          %v983 = vmul.f32 %v856, %v856
          %v984 = vmul.f32 %v861, %v861
          %v985 = vmul.f32 %v864, %v864
          %v986 = vadd.f32 %v970, %v971
          %v987 = vadd.f32 %v986, %v972
          %v988 = vadd.f32 %v987, %v973
          %v989 = vadd.f32 %v988, %v974
          %v990 = vadd.f32 %v989, %v975
          %v991 = vadd.f32 %v990, %v976
          %v992 = vadd.f32 %v991, %v977
          %v993 = vadd.f32 %v992, %v978
          %v994 = vadd.f32 %v993, %v979
          %v995 = vadd.f32 %v994, %v980
          %v996 = vadd.f32 %v995, %v981
          %v997 = vadd.f32 %v996, %v982
          %v998 = vadd.f32 %v997, %v983
          %v999 = vadd.f32 %v998, %v984
          %v1000 = vadd.f32 %v999, %v985
          %v1001 = vrot.slane %v1000, 4
          %v1002 = vadd.f32 %v1000, %v1001
          %v1003 = vrot.slane %v1002, 2
          %v1004 = vadd.f32 %v1002, %v1003
          %v1005 = vrot.slane %v1004, 1
          %v1006 = vadd.f32 %v1004, %v1005
          %1007 = vst [vmem:[%s296 + $0x1] sm:$0x1] %v1006
        $region56: #{tpu_custom_call.1} parent=31 // pred_fallthru
          _
        %s1008 = sand.u32 %s123, 1
        %s1009 = scalar_lea.sflag [#allocation5], %s1008
        %s1010 = sand.u32 %s123, 1
        %s1011 = smul.addr %s1010, 64
        %s1012 = scalar_lea.vmem [#allocation9], %s1011
        %s1013 = sand.u32 %s149, 1
        %s1014 = scalar_lea.sflag [#allocation11], %s1013
        %s1015 = sand.u32 %s149, 1
        %s1016 = smul.addr %s1015, 8
        %s1017 = scalar_lea.vmem [#allocation10], %s1016
        // Predicated region
        $region57: #{tpu_custom_call.1} parent=31 // pred_check
          %p1018 = pneg %p133
        $region58: #{tpu_custom_call.1} parent=31 // pred_check_branch
          %1020 = sbr.rel (%p1018) target = $region60
        $region59: #{tpu_custom_call.1} parent=31 // pred_region
          %s1021 = smul.u32 16, %s32
          %s1023 = ssub.s32 1024, 1024
          %1024 = vsyncadd %s1009, %s1023
          %s1025 = smul.addr %s1021, 64
          %s1026 = scalar_lea.hbm %s3, %s1025
          %s1027 = sshll.u32 %s1012, 4
          %s1028 = int_to_ptr.vmem [resolvable:$true] %s1027
          %1033 = dma.vmem_to_hbm [thread:$0]  %s1028, 1024, %s1026, %s1009, 64, 64, 4
        $region60: #{tpu_custom_call.1} parent=31 // pred_fallthru
          _
        // Predicated region
        $region61: #{tpu_custom_call.1} parent=31 // pred_check
          %p1034 = pneg %p159
        $region62: #{tpu_custom_call.1} parent=31 // pred_check_branch
          %1036 = sbr.rel (%p1034) target = $region64
        $region63: #{tpu_custom_call.1} parent=31 // pred_region
          %s1038 = ssub.s32 128, 128
          %1039 = vsyncadd %s1014, %s1038
          %s1040 = smul.addr %s32, 128
          %s1041 = scalar_lea.hbm %s4, %s1040
          %s1043 = sshll.u32 %s1017, 4
          %s1044 = int_to_ptr.vmem [resolvable:$true] %s1043
          %1046 = dma.vmem_to_hbm [thread:$0]  %s1044, 128, %s1041, %s1014
        $region64: #{tpu_custom_call.1} parent=31 // pred_fallthru
          _
      $region32: #{tpu_custom_call.1} parent=5 // pred_fallthru
        _
      %p1047 = scmp.le.s32.totalorder 2, %s23
      // Predicated region
      $region65: #{tpu_custom_call.1} parent=5 // pred_check
        %p1048 = pneg %p1047
      $region66: #{tpu_custom_call.1} parent=5 // pred_check_branch
        %1050 = sbr.rel (%p1048) target = $region68
      $region67: #{tpu_custom_call.1} parent=5 // pred_region
        %s1051 = ssub.s32 %s23, 2
        // Predicated region
        $region69: #{tpu_custom_call.1} parent=67 // pred_check
          %p1052 = pneg %p139
        $region70: #{tpu_custom_call.1} parent=67 // pred_check_branch
          %1054 = sbr.rel (%p1052) target = $region72
        $region71: #{tpu_custom_call.1} parent=67 // pred_region
          %s1055 = sand.u32 %s124, 1
          %s1056 = scalar_lea.sflag [#allocation5], %s1055
          %s1057 = sand.u32 %s124, 1
          %s1058 = smul.addr %s1057, 64
          %s1059 = scalar_lea.vmem [#allocation9], %s1058
          %1060 = dma.done %s1056, 1024
        $region72: #{tpu_custom_call.1} parent=67 // pred_fallthru
          _
        // Predicated region
        $region73: #{tpu_custom_call.1} parent=67 // pred_check
          %p1061 = pneg %p165
        $region74: #{tpu_custom_call.1} parent=67 // pred_check_branch
          %1063 = sbr.rel (%p1061) target = $region76
        $region75: #{tpu_custom_call.1} parent=67 // pred_region
          %s1064 = sand.u32 %s150, 1
          %s1065 = scalar_lea.sflag [#allocation11], %s1064
          %s1066 = sand.u32 %s150, 1
          %s1067 = smul.addr %s1066, 8
          %s1068 = scalar_lea.vmem [#allocation10], %s1067
          %1069 = dma.done %s1065, 128
        $region76: #{tpu_custom_call.1} parent=67 // pred_fallthru
          _
      $region68: #{tpu_custom_call.1} parent=5 // pred_fallthru
        _
    $region6: #{tpu_custom_call.1} parent=1 // loop_footer
      %s27 = sadd.s32 1, %s23
    $region7: #{tpu_custom_call.1} parent=1 // loop_footer_branch
      %22 = sbr.rel target = $region3
    $region8: #{tpu_custom_call.1} parent=1 // loop_exit
      _
    %1070 = vsyncpa [#allocation4], 1
    %s1071 = scalar_lea.sflag [#allocation4], 1
    %1072 = vsyncpa %s1071, 1
    %1073 = vsyncpa [#allocation7], 1
    %s1074 = scalar_lea.sflag [#allocation7], 1
    %1075 = vsyncpa %s1074, 1
    %1076 = vsyncpa [#allocation5], 1
    %s1077 = scalar_lea.sflag [#allocation5], 1
    %1078 = vsyncpa %s1077, 1
    %1079 = vsyncpa [#allocation11], 1
    %s1080 = scalar_lea.sflag [#allocation11], 1
    %1081 = vsyncpa %s1080, 1

</llo_original>
